<compile_context>
chip_gen: v7x
topology: tpu7x:2x2x1
jax: 0.10.0
libtpu: 0.0.40
codegen_flags: <defaults>
</compile_context>

<pallas_src>
import functools

import jax
import jax.numpy as jnp
from jax.experimental import pallas as pl
from jax.experimental.pallas import tpu as pltpu

BN_EPS = 1e-5


def _round_up(x, m):
    return (x + m - 1) // m * m


def _cdiv(a, b):
    return -(-a // b)


def _pad2(a, rows, cols):
    return jnp.pad(a, ((0, rows - a.shape[0]), (0, cols - a.shape[1])))


def _vmem_limit(block_bytes):
    """Scoped-VMEM limit from the actual (double-buffered) working set plus slack, clamped
    to what every TPU generation can grant (v7x physical VMEM is 64 MiB)."""
    return int(min(64 * 2**20, max(8 * 2**20, 2 * block_bytes + (2 << 20))))


# ---------------------------------------------------------------------------
# Fused single-call kernel: whole (padded) batch resident in VMEM, all layers.
# ---------------------------------------------------------------------------
def _fused_mlp_kernel(*refs, num_hidden, n_valid, pb, has_emb, has_cont):
    it = iter(refs)

    mask = None
    if pb != n_valid:
        row = jax.lax.broadcasted_iota(jnp.int32, (pb, 1), 0)
        mask = row < n_valid
    inv_n = 1.0 / float(n_valid)

    def batch_stats(h):
        # Exact full-batch BN stats; centered two-pass form avoids E[x^2]-mean^2 cancellation.
        hm = h if mask is None else jnp.where(mask, h, 0.0)
        mean = jnp.sum(hm, axis=0, keepdims=True) * inv_n
        d = h - mean
        if mask is not None:
            d = jnp.where(mask, d, 0.0)
        var = jnp.sum(d * d, axis=0, keepdims=True) * inv_n
        return mean, var

    def bn_apply(h, gamma, beta):
        mean, var = batch_stats(h)
        scale = gamma * jax.lax.rsqrt(var + BN_EPS)
        return h * scale + (beta - mean * scale)

    x_emb = next(it)[...] if has_emb else None
    if has_cont:
        x_cont = next(it)[...].astype(jnp.float32)
        g_c = next(it)[...]
        b_c = next(it)[...]
        x_cont = bn_apply(x_cont, g_c, b_c)          # bn_cont, exact batch stats

    # Layer 0: Linear(no bias) over [emb | cont] as two small-K dots (no host-side concat).
    acc = None
    if has_emb:
        w0e = next(it)[...]
        acc = jnp.dot(x_emb.astype(jnp.bfloat16), w0e,
                      preferred_element_type=jnp.float32)
    if has_cont:
        w0c = next(it)[...]
        part = jnp.dot(x_cont.astype(jnp.bfloat16), w0c,
                       preferred_element_type=jnp.float32)
        acc = part if acc is None else acc + part
    gamma = next(it)[...]
    beta = next(it)[...]
    h = jnp.maximum(acc, 0.0)

    # Remaining hidden layers: BN(prev) -> Linear -> ReLU.
    for _ in range(1, num_hidden):
        xn = bn_apply(h, gamma, beta)
        w = next(it)[...]
        gamma = next(it)[...]
        beta = next(it)[...]
        h = jnp.maximum(
            jnp.dot(xn.astype(jnp.bfloat16), w, preferred_element_type=jnp.float32),
            0.0)

    # Final Linear (bias, no BN, no activation), lane-dense 128-padded output slab.
    xn = bn_apply(h, gamma, beta)
    w_out = next(it)[...]
    bias = next(it)[...]
    o_ref = next(it)
    out = jnp.dot(xn.astype(jnp.bfloat16), w_out,
                  preferred_element_type=jnp.float32) + bias
    o_ref[...] = out.astype(o_ref.dtype)


# ---------------------------------------------------------------------------
# Multi-tile kernel: one Linear layer, batch-tiled.  Optionally consumes the previous
# layer's per-tile BN partials (merged in-kernel) and emits its own.
# ---------------------------------------------------------------------------
def _layer_kernel(*refs, first, has_emb, has_cont, apply_relu, emit_stats,
                  has_bias, tile_rows, num_tiles, n_valid):
    it = iter(refs)
    if first:
        x_emb_ref = next(it) if has_emb else None
        if has_cont:
            x_cont_ref = next(it)
            scale_c = next(it)[...]
            shift_c = next(it)[...]
        w_emb_ref = next(it) if has_emb else None
        w_cont_ref = next(it) if has_cont else None
    else:
        x_ref = next(it)
        mean_ref = next(it)
        m2_ref = next(it)
        gamma = next(it)[...]
        beta = next(it)[...]
        w_ref = next(it)
    bias_ref = next(it) if has_bias else None
    o_ref = next(it)
    if emit_stats:
        mean_out = next(it)
        m2_out = next(it)

    valid_last = n_valid - (num_tiles - 1) * tile_rows
    inv_n = 1.0 / float(n_valid)

    if first:
        acc = None
        if has_emb:
            acc = jnp.dot(x_emb_ref[...].astype(jnp.bfloat16), w_emb_ref[...],
                          preferred_element_type=jnp.float32)
        if has_cont:
            # bn_cont folded (host-side full-batch stats) into a single f32 FMA.
            xc = x_cont_ref[...].astype(jnp.float32) * scale_c + shift_c
            part = jnp.dot(xc.astype(jnp.bfloat16), w_cont_ref[...],
                           preferred_element_type=jnp.float32)
            acc = part if acc is None else acc + part
        h = acc
    else:
        # Finish the cross-tile BN reduction in-kernel: Chan/Welford merge of per-tile
        # (mean, centered-M2) partials, then fold gamma/beta into one scale/shift FMA.
        mean_t = mean_ref[...]                              # (T, 1, K)
        m2_t = m2_ref[...]                                  # (T, 1, K)
        last = num_tiles - 1
        extra = float(valid_last - tile_rows)               # 0 when batch is unpadded
        mean = (jnp.sum(mean_t, axis=0) * float(tile_rows)
                + mean_t[last] * extra) * inv_n             # (1, K)
        d2 = (mean_t - mean) ** 2
        m2 = (jnp.sum(m2_t, axis=0)
              + jnp.sum(d2, axis=0) * float(tile_rows) + d2[last] * extra)
        var = m2 * inv_n                                    # biased (PyTorch training mode)
        scale = gamma * jax.lax.rsqrt(var + BN_EPS)
        shift = beta - mean * scale
        xn = x_ref[...].astype(jnp.float32) * scale + shift
        h = jnp.dot(xn.astype(jnp.bfloat16), w_ref[...],
                    preferred_element_type=jnp.float32)

    if has_bias:
        h = h + bias_ref[...]
    if apply_relu:
        h = jnp.maximum(h, 0.0)
    o_ref[...] = h.astype(o_ref.dtype)

    if emit_stats:
        def write_stats(count, row_mask):
            hm = h if row_mask is None else jnp.where(row_mask, h, 0.0)
            mean = jnp.sum(hm, axis=0, keepdims=True) * (1.0 / count)
            d = h - mean
            if row_mask is not None:
                d = jnp.where(row_mask, d, 0.0)
            m2 = jnp.sum(d * d, axis=0, keepdims=True)      # centered partial M2
            mean_out[...] = mean[None]
            m2_out[...] = m2[None]

        def last_tile_mask():
            row = jax.lax.broadcasted_iota(jnp.int32, (tile_rows, 1), 0)
            return row < valid_last

        if valid_last == tile_rows:            # batch is an exact multiple of the tile
            write_stats(float(tile_rows), None)
        elif num_tiles == 1:
            write_stats(float(valid_last), last_tile_mask())
        else:
            is_last = pl.program_id(0) == num_tiles - 1

            @pl.when(is_last)
            def _():
                write_stats(float(valid_last), last_tile_mask())

            @pl.when(jnp.logical_not(is_last))
            def _():
                write_stats(float(tile_rows), None)


def _run_tiled_layer(inputs, in_specs, out_shape, out_specs, kernel_fn,
                     num_tiles, flops, bytes_accessed, vmem_bytes):
    return pl.pallas_call(
        kernel_fn,
        grid=(num_tiles,),
        in_specs=in_specs,
        out_specs=out_specs,
        out_shape=out_shape,
        compiler_params=pltpu.CompilerParams(
            dimension_semantics=("parallel",),
            vmem_limit_bytes=vmem_bytes),
        cost_estimate=pl.CostEstimate(flops=int(flops), transcendentals=0,
                                      bytes_accessed=int(bytes_accessed)),
    )(*inputs)


# ---------------------------------------------------------------------------
# Forward pass wrapper.
# ---------------------------------------------------------------------------
def tabular_forward(x_cat, x_cont, params, *, block_batch=512,
                    fuse_vmem_budget=24 * 2**20, y_range=None):
    if y_range is not None:
        # TODO(synk): y_range / SigmoidRange head not implemented (y_range=None in this config).
        raise NotImplementedError("y_range / SigmoidRange is not supported by this kernel")

    # Embedding gather + concat (glue). emb_drop / dropout are identity (p=0).
    # TODO(synk): fuse the gather into the first kernel (scalar-prefetch x_cat, keep the small
    # embedding tables VMEM-resident) to remove this XLA gather/concat HBM round trip.
    emb_tables = params["emb_tables"]
    if emb_tables:
        embs = [emb_tables[i][x_cat[:, i].astype(jnp.int32)] for i in range(len(emb_tables))]
        x_emb = jnp.concatenate(embs, axis=1).astype(jnp.float32)
        n_emb = x_emb.shape[1]
    else:
        x_emb, n_emb = None, 0
    has_cont = x_cont is not None and x_cont.shape[1] > 0
    if has_cont:
        x_cont = x_cont.astype(jnp.float32)
        n_cont = x_cont.shape[1]
    else:
        n_cont = 0
    batch = x_cat.shape[0] if n_emb else x_cont.shape[0]

    hidden = params["hidden"]
    num_hidden = len(hidden)
    w_out, b_out = params["w_out"], params["b_out"]
    out_sz = w_out.shape[1]

    # ---- padded geometry: hidden widths and output width padded to multiples of 128
    # (lane-dense stores); input feature groups padded to multiples of 16 (bf16 K packing).
    n_emb_p = _round_up(n_emb, 16) if n_emb else 0
    n_cont_p = _round_up(n_cont, 16) if has_cont else 0
    widths_p = [_round_up(h["w"].shape[1], 128) for h in hidden]
    nout_p = _round_up(out_sz, 128)

    # ---- pad weights / BN params once (gamma/beta padded with 0 so padded columns stay 0).
    w0 = hidden[0]["w"]
    if n_emb:
        w0_emb = _pad2(w0[:n_emb], n_emb_p, widths_p[0]).astype(jnp.bfloat16)
    if has_cont:
        w0_cont = _pad2(w0[n_emb:], n_cont_p, widths_p[0]).astype(jnp.bfloat16)
        g_cont_p = _pad2(params["g_cont"], 1, n_cont_p).astype(jnp.float32)
        b_cont_p = _pad2(params["b_cont"], 1, n_cont_p).astype(jnp.float32)
    gammas = [_pad2(h["g"], 1, wp).astype(jnp.float32) for h, wp in zip(hidden, widths_p)]
    betas = [_pad2(h["b"], 1, wp).astype(jnp.float32) for h, wp in zip(hidden, widths_p)]
    ws = [_pad2(hidden[i]["w"], widths_p[i - 1], widths_p[i]).astype(jnp.bfloat16)
          for i in range(1, num_hidden)]
    w_out_p = _pad2(w_out, widths_p[-1], nout_p).astype(jnp.bfloat16)
    b_out_p = _pad2(b_out, 1, nout_p).astype(jnp.float32)

    weight_bytes = (w0_emb.size * 2 if n_emb else 0) + (w0_cont.size * 2 if has_cont else 0)
    weight_bytes += sum(w.size * 2 for w in ws) + w_out_p.size * 2
    weight_bytes += sum(g.size * 4 + b.size * 4 for g, b in zip(gammas, betas))
    weight_bytes += b_out_p.size * 4 + (g_cont_p.size * 8 if has_cont else 0)

    # ------------------ fused single-call path (whole padded batch in one VMEM tile) -------
    pb_fuse = _round_up(batch, 8)
    max_w = max(widths_p + [nout_p])
    fuse_bytes = (weight_bytes
                  + pb_fuse * (n_emb_p + n_cont_p) * 4      # resident inputs
                  + pb_fuse * nout_p * 4                    # resident output
                  + 3 * pb_fuse * max_w * 4)                # live intermediates (headroom)
    if pb_fuse <= block_batch and fuse_bytes <= fuse_vmem_budget:
        inputs = []
        if n_emb:
            inputs.append(_pad2(x_emb, pb_fuse, n_emb_p))
        if has_cont:
            inputs += [_pad2(x_cont, pb_fuse, n_cont_p), g_cont_p, b_cont_p]
        if n_emb:
            inputs.append(w0_emb)
        if has_cont:
            inputs.append(w0_cont)
        inputs += [gammas[0], betas[0]]
        for i in range(1, num_hidden):
            inputs += [ws[i - 1], gammas[i], betas[i]]
        inputs += [w_out_p, b_out_p]

        flops = 2 * pb_fuse * (n_emb_p + n_cont_p) * widths_p[0]
        for i in range(1, num_hidden):
            flops += 2 * pb_fuse * widths_p[i - 1] * widths_p[i]
        flops += 2 * pb_fuse * widths_p[-1] * nout_p

        kernel = functools.partial(
            _fused_mlp_kernel, num_hidden=num_hidden, n_valid=batch, pb=pb_fuse,
            has_emb=bool(n_emb), has_cont=has_cont)
        out = pl.pallas_call(
            kernel,
            out_shape=jax.ShapeDtypeStruct((pb_fuse, nout_p), jnp.float32),
            compiler_params=pltpu.CompilerParams(
                vmem_limit_bytes=_vmem_limit(fuse_bytes)),
            cost_estimate=pl.CostEstimate(flops=int(flops), transcendentals=0,
                                          bytes_accessed=int(fuse_bytes)),
        )(*inputs)
        return out[:batch, :out_sz]

    # ------------------ multi-tile pipelined path -------------------------------------------
    # Row tiles are multiples of 16 (bf16 sublane packing); prefer an even tile count so the
    # "parallel" batch axis can shard across both v7x TensorCores.
    tile_rows = _round_up(min(block_batch, _round_up(batch, 16)), 16)
    num_tiles = _cdiv(batch, tile_rows)
    if num_tiles > 1 and num_tiles % 2 == 1:
        alt = _round_up(_cdiv(batch, num_tiles + 1), 16)
        if _cdiv(batch, alt) % 2 == 0:
            tile_rows = alt
            num_tiles = _cdiv(batch, alt)
    pb = num_tiles * tile_rows

    x_tile = lambda cols: pl.BlockSpec((tile_rows, cols), lambda i: (i, 0))
    res2 = lambda r, c: pl.BlockSpec((r, c), lambda i: (0, 0))
    res3 = lambda shape: pl.BlockSpec(shape, lambda i: (0, 0, 0))
    stat_shape = lambda n: jax.ShapeDtypeStruct((num_tiles, 1, n), jnp.float32)
    stat_spec = lambda n: pl.BlockSpec((1, 1, n), lambda i: (i, 0, 0))

    # bn_cont folded (full-batch stats, tiny host reduction) into a per-feature scale/shift.
    if has_cont:
        mean_c = jnp.mean(x_cont, axis=0, keepdims=True)
        var_c = jnp.mean((x_cont - mean_c) ** 2, axis=0, keepdims=True)
        scale_c = params["g_cont"] * jax.lax.rsqrt(var_c + BN_EPS)
        shift_c = params["b_cont"] - mean_c * scale_c
        scale_c = _pad2(scale_c, 1, n_cont_p).astype(jnp.float32)
        shift_c = _pad2(shift_c, 1, n_cont_p).astype(jnp.float32)

    # --- first hidden layer ---
    n0 = widths_p[0]
    inputs, in_specs, block_bytes = [], [], 0
    if n_emb:
        inputs.append(_pad2(x_emb, pb, n_emb_p))
        in_specs.append(x_tile(n_emb_p))
        block_bytes += tile_rows * n_emb_p * 4 + w0_emb.size * 2
    if has_cont:
        inputs += [_pad2(x_cont, pb, n_cont_p), scale_c, shift_c]
        in_specs += [x_tile(n_cont_p), res2(1, n_cont_p), res2(1, n_cont_p)]
        block_bytes += tile_rows * n_cont_p * 4 + 2 * n_cont_p * 4 + w0_cont.size * 2
    if n_emb:
        inputs.append(w0_emb)
        in_specs.append(res2(n_emb_p, n0))
    if has_cont:
        inputs.append(w0_cont)
        in_specs.append(res2(n_cont_p, n0))
    out_shape = [jax.ShapeDtypeStruct((pb, n0), jnp.bfloat16), stat_shape(n0), stat_shape(n0)]
    out_specs = [x_tile(n0), stat_spec(n0), stat_spec(n0)]
    block_bytes += tile_rows * n0 * 2 + 2 * n0 * 4

    kernel = functools.partial(
        _layer_kernel, first=True, has_emb=bool(n_emb), has_cont=has_cont,
        apply_relu=True, emit_stats=True, has_bias=False,
        tile_rows=tile_rows, num_tiles=num_tiles, n_valid=batch)
    a, s_mean, s_m2 = _run_tiled_layer(
        inputs, in_specs, out_shape, out_specs, kernel, num_tiles,
        flops=2 * pb * (n_emb_p + n_cont_p) * n0,
        bytes_accessed=pb * (n_emb_p + n_cont_p) * 4 + pb * n0 * 2 + weight_bytes,
        vmem_bytes=_vmem_limit(block_bytes))

    # --- remaining hidden layers: previous layer's BN merged/folded in-kernel ---
    for li in range(1, num_hidden):
        kp, npi = widths_p[li - 1], widths_p[li]
        inputs = [a, s_mean, s_m2, gammas[li - 1], betas[li - 1], ws[li - 1]]
        in_specs = [x_tile(kp), res3((num_tiles, 1, kp)), res3((num_tiles, 1, kp)),
                    res2(1, kp), res2(1, kp), res2(kp, npi)]
        out_shape = [jax.ShapeDtypeStruct((pb, npi), jnp.bfloat16),
                     stat_shape(npi), stat_shape(npi)]
        out_specs = [x_tile(npi), stat_spec(npi), stat_spec(npi)]
        block_bytes = (tile_rows * kp * 2 + tile_rows * npi * 2 + kp * npi * 2
                       + 2 * num_tiles * kp * 4 + 2 * kp * 4 + 2 * npi * 4)
        kernel = functools.partial(
            _layer_kernel, first=False, has_emb=False, has_cont=False,
            apply_relu=True, emit_stats=True, has_bias=False,
            tile_rows=tile_rows, num_tiles=num_tiles, n_valid=batch)
        a, s_mean, s_m2 = _run_tiled_layer(
            inputs, in_specs, out_shape, out_specs, kernel, num_tiles,
            flops=2 * pb * kp * npi,
            bytes_accessed=pb * kp * 2 + pb * npi * 2 + kp * npi * 2,
            vmem_bytes=_vmem_limit(block_bytes))

    # --- final Linear (bias, no act, no BN) into a lane-dense 128-padded output slab ---
    kp = widths_p[-1]
    inputs = [a, s_mean, s_m2, gammas[-1], betas[-1], w_out_p, b_out_p]
    in_specs = [x_tile(kp), res3((num_tiles, 1, kp)), res3((num_tiles, 1, kp)),
                res2(1, kp), res2(1, kp), res2(kp, nout_p), res2(1, nout_p)]
    out_shape = jax.ShapeDtypeStruct((pb, nout_p), jnp.float32)
    out_specs = x_tile(nout_p)
    block_bytes = (tile_rows * kp * 2 + tile_rows * nout_p * 4 + kp * nout_p * 2
                   + 2 * num_tiles * kp * 4 + 2 * kp * 4 + nout_p * 4)
    kernel = functools.partial(
        _layer_kernel, first=False, has_emb=False, has_cont=False,
        apply_relu=False, emit_stats=False, has_bias=True,
        tile_rows=tile_rows, num_tiles=num_tiles, n_valid=batch)
    out = _run_tiled_layer(
        inputs, in_specs, out_shape, out_specs, kernel, num_tiles,
        flops=2 * pb * kp * nout_p,
        bytes_accessed=pb * kp * 2 + pb * nout_p * 4 + kp * nout_p * 2,
        vmem_bytes=_vmem_limit(block_bytes))
    return out[:batch, :out_sz]


# ---------------------------------------------------------------------------
# Pure-JAX reference (mirrors the PyTorch forward exactly, f32 throughout).
# ---------------------------------------------------------------------------
def _batchnorm_train(x, gamma, beta):
    mean = jnp.mean(x, axis=0, keepdims=True)
    var = jnp.mean((x - mean) ** 2, axis=0, keepdims=True)
    return (x - mean) * jax.lax.rsqrt(var + BN_EPS) * gamma + beta


def tabular_reference(x_cat, x_cont, params):
    emb_tables = params["emb_tables"]
    embs = [emb_tables[i][x_cat[:, i].astype(jnp.int32)] for i in range(len(emb_tables))]
    x = jnp.concatenate(embs, axis=1)
    xc = _batchnorm_train(x_cont.astype(jnp.float32), params["g_cont"], params["b_cont"])
    x = jnp.concatenate([x, xc], axis=1)
    for layer in params["hidden"]:
        x = jnp.maximum(x @ layer["w"], 0.0)
        x = _batchnorm_train(x, layer["g"], layer["b"])
    return x @ params["w_out"] + params["b_out"]


def init_params(key, emb_szs, n_cont, layers, out_sz):
    keys = jax.random.split(key, 3 + len(emb_szs) + len(layers))
    params = {}
    params["emb_tables"] = [
        jax.random.normal(keys[i], (ni, nf), jnp.float32)
        for i, (ni, nf) in enumerate(emb_szs)
    ]
    n_emb = sum(nf for _, nf in emb_szs)
    # bn_cont: plain nn.BatchNorm1d default init (weight=1, bias=0)
    params["g_cont"] = jnp.ones((1, n_cont), jnp.float32)
    params["b_cont"] = jnp.zeros((1, n_cont), jnp.float32)

    sizes = [n_emb + n_cont] + list(layers)
    hidden = []
    for i, (n_in, n_out) in enumerate(zip(sizes[:-1], sizes[1:])):
        w = jax.random.normal(keys[len(emb_szs) + i], (n_in, n_out), jnp.float32) * (1.0 / jnp.sqrt(n_in))
        hidden.append({
            "w": w,
            # _get_norm: weight filled with 1.0, bias filled with 0.001
            "g": jnp.ones((1, n_out), jnp.float32),
            "b": jnp.full((1, n_out), 0.001, jnp.float32),
        })
    params["hidden"] = hidden

    kw, kb = keys[-2], keys[-1]
    params["w_out"] = jax.random.normal(kw, (sizes[-1], out_sz), jnp.float32) * (1.0 / jnp.sqrt(sizes[-1]))
    params["b_out"] = jax.random.normal(kb, (1, out_sz), jnp.float32) * 0.01
    return params


if __name__ == "__main__":
    def run_case(key, emb_szs, n_cont, layers, out_sz, batch, block_batch):
        k_params, k_cat, k_cont = jax.random.split(key, 3)
        params = init_params(k_params, emb_szs, n_cont, layers, out_sz)
        x_cat = jnp.stack(
            [jax.random.randint(jax.random.fold_in(k_cat, i), (batch,), 0, ni)
             for i, (ni, _) in enumerate(emb_szs)],
            axis=1,
        ).astype(jnp.int32)
        x_cont = jax.random.normal(k_cont, (batch, n_cont), jnp.float32)

        out = jax.block_until_ready(
            tabular_forward(x_cat, x_cont, params, block_batch=block_batch))
        ref = jax.block_until_ready(tabular_reference(x_cat, x_cont, params))
        assert out.shape == (batch, out_sz), (out.shape, (batch, out_sz))
        # bf16 MXU operands + bf16 inter-layer activations (f32 accumulate / BN) => looser
        # tolerance than pure f32.
        assert jnp.allclose(out, ref, rtol=3e-2, atol=3e-2), float(jnp.max(jnp.abs(out - ref)))

    base_key = jax.random.PRNGKey(0)
    # Case 1: fused single-call path, no batch padding.
    run_case(base_key, emb_szs=[(10, 3), (7, 4)], n_cont=5, layers=[64, 32],
             out_sz=4, batch=8, block_batch=512)
    # Case 2: fused path with padded batch rows (masked in-kernel BN stats).
    run_case(jax.random.fold_in(base_key, 1), emb_szs=[(10, 3), (7, 4)], n_cont=5,
             layers=[64, 32], out_sz=4, batch=45, block_batch=512)
    # Case 3: multi-tile path with padded last tile (pl.when-gated masking + Chan merge).
    run_case(jax.random.fold_in(base_key, 2), emb_szs=[(10, 3), (7, 4)], n_cont=5,
             layers=[64, 32], out_sz=4, batch=50, block_batch=16)
    # Case 4: multi-tile path, exact tiles, even tile count (v7x two-TC sharding).
    run_case(jax.random.fold_in(base_key, 3), emb_szs=[(12, 6), (9, 4)], n_cont=7,
             layers=[96, 48], out_sz=3, batch=64, block_batch=32)

    print("KERNEL_OK")
</pallas_src>

<mosaic_0001>
module attributes {stable_mosaic.version = 11 : i64} {
  func.func @_fused_mlp_kernel(%arg0: memref<8x16xf32, #tpu.memory_space<vmem>>, %arg1: memref<8x16xf32, #tpu.memory_space<vmem>>, %arg2: memref<1x16xf32, #tpu.memory_space<vmem>>, %arg3: memref<1x16xf32, #tpu.memory_space<vmem>>, %arg4: memref<16x128xbf16, #tpu.memory_space<vmem>>, %arg5: memref<16x128xbf16, #tpu.memory_space<vmem>>, %arg6: memref<1x128xf32, #tpu.memory_space<vmem>>, %arg7: memref<1x128xf32, #tpu.memory_space<vmem>>, %arg8: memref<128x128xbf16, #tpu.memory_space<vmem>>, %arg9: memref<1x128xf32, #tpu.memory_space<vmem>>, %arg10: memref<1x128xf32, #tpu.memory_space<vmem>>, %arg11: memref<128x128xbf16, #tpu.memory_space<vmem>>, %arg12: memref<1x128xf32, #tpu.memory_space<vmem>>, %arg13: memref<8x128xf32, #tpu.memory_space<vmem>>) attributes {dimension_semantics = [], scalar_prefetch = 0 : i64, scratch_operands = 0 : i64, tpu.core_type = #tpu.core_type<tc>} {
    %c0 = arith.constant 0 : index
    %c0_0 = arith.constant 0 : index
    %0 = vector.load %arg0[%c0, %c0_0] : memref<8x16xf32, #tpu.memory_space<vmem>>, vector<8x16xf32>
    %c0_1 = arith.constant 0 : index
    %c0_2 = arith.constant 0 : index
    %1 = vector.load %arg1[%c0_1, %c0_2] : memref<8x16xf32, #tpu.memory_space<vmem>>, vector<8x16xf32>
    %c0_3 = arith.constant 0 : index
    %c0_4 = arith.constant 0 : index
    %2 = vector.load %arg2[%c0_3, %c0_4] : memref<1x16xf32, #tpu.memory_space<vmem>>, vector<1x16xf32>
    %c0_5 = arith.constant 0 : index
    %c0_6 = arith.constant 0 : index
    %3 = vector.load %arg3[%c0_5, %c0_6] : memref<1x16xf32, #tpu.memory_space<vmem>>, vector<1x16xf32>
    %cst = arith.constant dense<0.000000e+00> : vector<16xf32>
    %4 = vector.multi_reduction <add>, %1, %cst [0] : vector<8x16xf32> to vector<16xf32>
    %5 = vector.shape_cast %4 : vector<16xf32> to vector<1x16xf32>
    %cst_7 = arith.constant 1.250000e-01 : f32
    %6 = vector.broadcast %cst_7 : f32 to vector<1x16xf32>
    %7 = arith.mulf %5, %6 : vector<1x16xf32>
    %8 = vector.broadcast %7 : vector<1x16xf32> to vector<8x16xf32>
    %9 = arith.subf %1, %8 : vector<8x16xf32>
    %10 = arith.mulf %9, %9 : vector<8x16xf32>
    %cst_8 = arith.constant dense<0.000000e+00> : vector<16xf32>
    %11 = vector.multi_reduction <add>, %10, %cst_8 [0] : vector<8x16xf32> to vector<16xf32>
    %12 = vector.shape_cast %11 : vector<16xf32> to vector<1x16xf32>
    %cst_9 = arith.constant 1.250000e-01 : f32
    %13 = vector.broadcast %cst_9 : f32 to vector<1x16xf32>
    %14 = arith.mulf %12, %13 : vector<1x16xf32>
    %cst_10 = arith.constant 9.99999974E-6 : f32
    %15 = vector.broadcast %cst_10 : f32 to vector<1x16xf32>
    %16 = arith.addf %14, %15 : vector<1x16xf32>
    %17 = math.rsqrt %16 : vector<1x16xf32>
    %18 = arith.mulf %2, %17 : vector<1x16xf32>
    %19 = vector.broadcast %18 : vector<1x16xf32> to vector<8x16xf32>
    %20 = arith.mulf %1, %19 : vector<8x16xf32>
    %21 = arith.mulf %7, %18 : vector<1x16xf32>
    %22 = arith.subf %3, %21 : vector<1x16xf32>
    %23 = vector.broadcast %22 : vector<1x16xf32> to vector<8x16xf32>
    %24 = arith.addf %20, %23 : vector<8x16xf32>
    %c0_11 = arith.constant 0 : index
    %c0_12 = arith.constant 0 : index
    %25 = vector.load %arg4[%c0_11, %c0_12] : memref<16x128xbf16, #tpu.memory_space<vmem>>, vector<16x128xbf16>
    %26 = arith.truncf %0 : vector<8x16xf32> to vector<8x16xbf16>
    %cst_13 = arith.constant dense<0.000000e+00> : vector<8x128xf32>
    %27 = tpu.matmul %26, %25, %cst_13 {dimension_numbers = #tpu.dot_dimension_numbers<[1], [0], [0], [1], [0, 0, 1, 1], [], []>} : vector<8x16xbf16>, vector<16x128xbf16>, vector<8x128xf32> -> vector<8x128xf32>
    %c0_14 = arith.constant 0 : index
    %c0_15 = arith.constant 0 : index
    %28 = vector.load %arg5[%c0_14, %c0_15] : memref<16x128xbf16, #tpu.memory_space<vmem>>, vector<16x128xbf16>
    %29 = arith.truncf %24 : vector<8x16xf32> to vector<8x16xbf16>
    %cst_16 = arith.constant dense<0.000000e+00> : vector<8x128xf32>
    %30 = tpu.matmul %29, %28, %cst_16 {dimension_numbers = #tpu.dot_dimension_numbers<[1], [0], [0], [1], [0, 0, 1, 1], [], []>} : vector<8x16xbf16>, vector<16x128xbf16>, vector<8x128xf32> -> vector<8x128xf32>
    %31 = arith.addf %27, %30 : vector<8x128xf32>
    %c0_17 = arith.constant 0 : index
    %c0_18 = arith.constant 0 : index
    %32 = vector.load %arg6[%c0_17, %c0_18] : memref<1x128xf32, #tpu.memory_space<vmem>>, vector<1x128xf32>
    %c0_19 = arith.constant 0 : index
    %c0_20 = arith.constant 0 : index
    %33 = vector.load %arg7[%c0_19, %c0_20] : memref<1x128xf32, #tpu.memory_space<vmem>>, vector<1x128xf32>
    %cst_21 = arith.constant 0.000000e+00 : f32
    %34 = vector.broadcast %cst_21 : f32 to vector<8x128xf32>
    %35 = arith.maximumf %31, %34 : vector<8x128xf32>
    %cst_22 = arith.constant dense<0.000000e+00> : vector<128xf32>
    %36 = vector.multi_reduction <add>, %35, %cst_22 [0] : vector<8x128xf32> to vector<128xf32>
    %37 = vector.shape_cast %36 : vector<128xf32> to vector<1x128xf32>
    %cst_23 = arith.constant 1.250000e-01 : f32
    %38 = vector.broadcast %cst_23 : f32 to vector<1x128xf32>
    %39 = arith.mulf %37, %38 : vector<1x128xf32>
    %40 = vector.broadcast %39 : vector<1x128xf32> to vector<8x128xf32>
    %41 = arith.subf %35, %40 : vector<8x128xf32>
    %42 = arith.mulf %41, %41 : vector<8x128xf32>
    %cst_24 = arith.constant dense<0.000000e+00> : vector<128xf32>
    %43 = vector.multi_reduction <add>, %42, %cst_24 [0] : vector<8x128xf32> to vector<128xf32>
    %44 = vector.shape_cast %43 : vector<128xf32> to vector<1x128xf32>
    %cst_25 = arith.constant 1.250000e-01 : f32
    %45 = vector.broadcast %cst_25 : f32 to vector<1x128xf32>
    %46 = arith.mulf %44, %45 : vector<1x128xf32>
    %cst_26 = arith.constant 9.99999974E-6 : f32
    %47 = vector.broadcast %cst_26 : f32 to vector<1x128xf32>
    %48 = arith.addf %46, %47 : vector<1x128xf32>
    %49 = math.rsqrt %48 : vector<1x128xf32>
    %50 = arith.mulf %32, %49 : vector<1x128xf32>
    %51 = vector.broadcast %50 : vector<1x128xf32> to vector<8x128xf32>
    %52 = arith.mulf %35, %51 : vector<8x128xf32>
    %53 = arith.mulf %39, %50 : vector<1x128xf32>
    %54 = arith.subf %33, %53 : vector<1x128xf32>
    %55 = vector.broadcast %54 : vector<1x128xf32> to vector<8x128xf32>
    %56 = arith.addf %52, %55 : vector<8x128xf32>
    %c0_27 = arith.constant 0 : index
    %c0_28 = arith.constant 0 : index
    %57 = vector.load %arg8[%c0_27, %c0_28] : memref<128x128xbf16, #tpu.memory_space<vmem>>, vector<128x128xbf16>
    %c0_29 = arith.constant 0 : index
    %c0_30 = arith.constant 0 : index
    %58 = vector.load %arg9[%c0_29, %c0_30] : memref<1x128xf32, #tpu.memory_space<vmem>>, vector<1x128xf32>
    %c0_31 = arith.constant 0 : index
    %c0_32 = arith.constant 0 : index
    %59 = vector.load %arg10[%c0_31, %c0_32] : memref<1x128xf32, #tpu.memory_space<vmem>>, vector<1x128xf32>
    %60 = arith.truncf %56 : vector<8x128xf32> to vector<8x128xbf16>
    %cst_33 = arith.constant dense<0.000000e+00> : vector<8x128xf32>
    %61 = tpu.matmul %60, %57, %cst_33 {dimension_numbers = #tpu.dot_dimension_numbers<[1], [0], [0], [1], [0, 0, 1, 1], [], []>} : vector<8x128xbf16>, vector<128x128xbf16>, vector<8x128xf32> -> vector<8x128xf32>
    %cst_34 = arith.constant 0.000000e+00 : f32
    %62 = vector.broadcast %cst_34 : f32 to vector<8x128xf32>
    %63 = arith.maximumf %61, %62 : vector<8x128xf32>
    %cst_35 = arith.constant dense<0.000000e+00> : vector<128xf32>
    %64 = vector.multi_reduction <add>, %63, %cst_35 [0] : vector<8x128xf32> to vector<128xf32>
    %65 = vector.shape_cast %64 : vector<128xf32> to vector<1x128xf32>
    %cst_36 = arith.constant 1.250000e-01 : f32
    %66 = vector.broadcast %cst_36 : f32 to vector<1x128xf32>
    %67 = arith.mulf %65, %66 : vector<1x128xf32>
    %68 = vector.broadcast %67 : vector<1x128xf32> to vector<8x128xf32>
    %69 = arith.subf %63, %68 : vector<8x128xf32>
    %70 = arith.mulf %69, %69 : vector<8x128xf32>
    %cst_37 = arith.constant dense<0.000000e+00> : vector<128xf32>
    %71 = vector.multi_reduction <add>, %70, %cst_37 [0] : vector<8x128xf32> to vector<128xf32>
    %72 = vector.shape_cast %71 : vector<128xf32> to vector<1x128xf32>
    %cst_38 = arith.constant 1.250000e-01 : f32
    %73 = vector.broadcast %cst_38 : f32 to vector<1x128xf32>
    %74 = arith.mulf %72, %73 : vector<1x128xf32>
    %cst_39 = arith.constant 9.99999974E-6 : f32
    %75 = vector.broadcast %cst_39 : f32 to vector<1x128xf32>
    %76 = arith.addf %74, %75 : vector<1x128xf32>
    %77 = math.rsqrt %76 : vector<1x128xf32>
    %78 = arith.mulf %58, %77 : vector<1x128xf32>
    %79 = vector.broadcast %78 : vector<1x128xf32> to vector<8x128xf32>
    %80 = arith.mulf %63, %79 : vector<8x128xf32>
    %81 = arith.mulf %67, %78 : vector<1x128xf32>
    %82 = arith.subf %59, %81 : vector<1x128xf32>
    %83 = vector.broadcast %82 : vector<1x128xf32> to vector<8x128xf32>
    %84 = arith.addf %80, %83 : vector<8x128xf32>
    %c0_40 = arith.constant 0 : index
    %c0_41 = arith.constant 0 : index
    %85 = vector.load %arg11[%c0_40, %c0_41] : memref<128x128xbf16, #tpu.memory_space<vmem>>, vector<128x128xbf16>
    %c0_42 = arith.constant 0 : index
    %c0_43 = arith.constant 0 : index
    %86 = vector.load %arg12[%c0_42, %c0_43] : memref<1x128xf32, #tpu.memory_space<vmem>>, vector<1x128xf32>
    %87 = arith.truncf %84 : vector<8x128xf32> to vector<8x128xbf16>
    %cst_44 = arith.constant dense<0.000000e+00> : vector<8x128xf32>
    %88 = tpu.matmul %87, %85, %cst_44 {dimension_numbers = #tpu.dot_dimension_numbers<[1], [0], [0], [1], [0, 0, 1, 1], [], []>} : vector<8x128xbf16>, vector<128x128xbf16>, vector<8x128xf32> -> vector<8x128xf32>
    %89 = vector.broadcast %86 : vector<1x128xf32> to vector<8x128xf32>
    %90 = arith.addf %88, %89 : vector<8x128xf32>
    %c0_45 = arith.constant 0 : index
    %c0_46 = arith.constant 0 : index
    %91 = vector.load %arg13[%c0_45, %c0_46] : memref<8x128xf32, #tpu.memory_space<vmem>>, vector<8x128xf32>
    tpu.vector_store %arg13[%c0_45, %c0_46], %90 {strides = array<i32>} : memref<8x128xf32, #tpu.memory_space<vmem>>, vector<8x128xf32>,
    return
  }
}

</mosaic_0001>

<llo_original>
// kernel: tpu_custom_call.1
$region0: #{tpu_custom_call.1}
  #allocation0 [shape = 'u32[]', space=smem, size = 0x4, offset = 0x4, fixed_abs, tag = 'smem constant byte address 0x4 - core index']
  #allocation1 [shape = 'u32[144,128]{1,0:T(1,128)}', space=vmem, size = 0x12000, scoped, tag = 'internal scratch']
  %s0 = inlined_call_operand.hbm [shape: f32[8,16], index: 0, kind: input, shape index: {}]
  %s1 = inlined_call_operand.hbm [shape: f32[8,16], index: 1, kind: input, shape index: {}]
  %s2 = inlined_call_operand.vmem [shape: f32[1,16], index: 2, kind: input, shape index: {}]
  %s3 = inlined_call_operand.vmem [shape: f32[1,16], index: 3, kind: input, shape index: {}]
  %s4 = inlined_call_operand.vmem [shape: bf16[16,128], index: 4, kind: input, shape index: {}]
  %s5 = inlined_call_operand.vmem [shape: bf16[16,128], index: 5, kind: input, shape index: {}]
  %s6 = inlined_call_operand.vmem [shape: f32[1,128], index: 6, kind: input, shape index: {}]
  %s7 = inlined_call_operand.vmem [shape: f32[1,128], index: 7, kind: input, shape index: {}]
  %s8 = inlined_call_operand.hbm [shape: bf16[128,128], index: 8, kind: input, shape index: {}]
  %s9 = inlined_call_operand.vmem [shape: f32[1,128], index: 9, kind: input, shape index: {}]
  %s10 = inlined_call_operand.vmem [shape: f32[1,128], index: 10, kind: input, shape index: {}]
  %s11 = inlined_call_operand.hbm [shape: bf16[128,128], index: 11, kind: input, shape index: {}]
  %s12 = inlined_call_operand.vmem [shape: f32[1,128], index: 12, kind: input, shape index: {}]
  %s13 = inlined_call_operand.hbm [shape: f32[8,128], index: 13, kind: output, shape index: {}]
  %s14 = sld [smem:[#allocation0]]
  $region78: #{tpu_custom_call.1} parent=0
    _
  %s16 = ssub.s32 1, %s14
  %s17 = scalar_select 0, %s16, %s14
  $region1: #{tpu_custom_call.1} parent=0
    #allocation2 [shape = 'u8[4096]{0}', space=vmem, size = 0x1000, scoped, tag = 'input window, operand 0, single buffered']
    #allocation3 [shape = 's32[1]{0}', space=sflag, size = 0x4, scoped, tag = 'scoped memory for tpu_custom_call.1']
    #allocation4 [shape = 's32[1]{0}', space=sflag, size = 0x4, scoped, tag = 'scoped memory for tpu_custom_call.1']
    #allocation5 [shape = 'u8[4096]{0}', space=vmem, size = 0x1000, scoped, tag = 'input window, operand 1, single buffered']
    #allocation6 [shape = 's32[1]{0}', space=sflag, size = 0x4, scoped, tag = 'scoped memory for tpu_custom_call.1']
    #allocation7 [shape = 'u8[32768]{0}', space=vmem, size = 0x8000, scoped, tag = 'input window, operand 8, single buffered']
    #allocation8 [shape = 'u8[32768]{0}', space=vmem, size = 0x8000, scoped, tag = 'input window, operand 11, single buffered']
    #allocation9 [shape = 's32[1]{0}', space=sflag, size = 0x4, scoped, tag = 'scoped memory for tpu_custom_call.1']
    #allocation10 [shape = 'u8[4096]{0}', space=vmem, size = 0x1000, scoped, tag = 'output window, operand 0, single buffered']
    %18 = vsyncpa [#allocation3], 0
    %19 = vsyncpa [#allocation6], 0
    %20 = vsyncpa [#allocation9], 0
    %21 = vsyncpa [#allocation4], 0
    // Predicated region
    $region2: #{tpu_custom_call.1} parent=1 // pred_check
      _
    $region3: #{tpu_custom_call.1} parent=1 // pred_check_branch
      %23 = sbr.rel (0) target = $region5
    $region4: #{tpu_custom_call.1} parent=1 // pred_region
      %s25 = ssub.s32 128, 128
      %26 = vsyncadd [#allocation3], %s25
      %s28 = sshll.u32 [#allocation2], 4
      %s29 = int_to_ptr.vmem [resolvable:$true] %s28
      %31 = dma.hbm_to_vmem [thread:$0]  %s0, 128, %s29, [#allocation3]
    $region5: #{tpu_custom_call.1} parent=1 // pred_fallthru
      _
    // Predicated region
    $region6: #{tpu_custom_call.1} parent=1 // pred_check
      _
    $region7: #{tpu_custom_call.1} parent=1 // pred_check_branch
      %33 = sbr.rel (0) target = $region9
    $region8: #{tpu_custom_call.1} parent=1 // pred_region
      %s35 = ssub.s32 128, 128
      %36 = vsyncadd [#allocation6], %s35
      %s38 = sshll.u32 [#allocation5], 4
      %s39 = int_to_ptr.vmem [resolvable:$true] %s38
      %41 = dma.hbm_to_vmem [thread:$0]  %s1, 128, %s39, [#allocation6]
    $region9: #{tpu_custom_call.1} parent=1 // pred_fallthru
      _
    // Predicated region
    $region10: #{tpu_custom_call.1} parent=1 // pred_check
      _
    $region11: #{tpu_custom_call.1} parent=1 // pred_check_branch
      %43 = sbr.rel (0) target = $region13
    $region12: #{tpu_custom_call.1} parent=1 // pred_region
      _
    $region13: #{tpu_custom_call.1} parent=1 // pred_fallthru
      _
    // Predicated region
    $region14: #{tpu_custom_call.1} parent=1 // pred_check
      _
    $region15: #{tpu_custom_call.1} parent=1 // pred_check_branch
      %45 = sbr.rel (0) target = $region17
    $region16: #{tpu_custom_call.1} parent=1 // pred_region
      _
    $region17: #{tpu_custom_call.1} parent=1 // pred_fallthru
      _
    // Predicated region
    $region18: #{tpu_custom_call.1} parent=1 // pred_check
      _
    $region19: #{tpu_custom_call.1} parent=1 // pred_check_branch
      %47 = sbr.rel (0) target = $region21
    $region20: #{tpu_custom_call.1} parent=1 // pred_region
      _
    $region21: #{tpu_custom_call.1} parent=1 // pred_fallthru
      _
    // Predicated region
    $region22: #{tpu_custom_call.1} parent=1 // pred_check
      _
    $region23: #{tpu_custom_call.1} parent=1 // pred_check_branch
      %49 = sbr.rel (0) target = $region25
    $region24: #{tpu_custom_call.1} parent=1 // pred_region
      _
    $region25: #{tpu_custom_call.1} parent=1 // pred_fallthru
      _
    // Predicated region
    $region26: #{tpu_custom_call.1} parent=1 // pred_check
      _
    $region27: #{tpu_custom_call.1} parent=1 // pred_check_branch
      %51 = sbr.rel (0) target = $region29
    $region28: #{tpu_custom_call.1} parent=1 // pred_region
      _
    $region29: #{tpu_custom_call.1} parent=1 // pred_fallthru
      _
    // Predicated region
    $region30: #{tpu_custom_call.1} parent=1 // pred_check
      _
    $region31: #{tpu_custom_call.1} parent=1 // pred_check_branch
      %53 = sbr.rel (0) target = $region33
    $region32: #{tpu_custom_call.1} parent=1 // pred_region
      _
    $region33: #{tpu_custom_call.1} parent=1 // pred_fallthru
      _
    // Predicated region
    $region34: #{tpu_custom_call.1} parent=1 // pred_check
      _
    $region35: #{tpu_custom_call.1} parent=1 // pred_check_branch
      %55 = sbr.rel (0) target = $region37
    $region36: #{tpu_custom_call.1} parent=1 // pred_region
      %s57 = ssub.s32 1024, 1024
      %58 = vsyncadd [#allocation6], %s57
      %s59 = sshll.u32 [#allocation7], 4
      %s60 = int_to_ptr.vmem [resolvable:$true] %s59
      %65 = dma.hbm_to_vmem [thread:$0]  %s8, 1024, %s60, [#allocation6], 64, 64, 4
    $region37: #{tpu_custom_call.1} parent=1 // pred_fallthru
      _
    // Predicated region
    $region38: #{tpu_custom_call.1} parent=1 // pred_check
      _
    $region39: #{tpu_custom_call.1} parent=1 // pred_check_branch
      %67 = sbr.rel (0) target = $region41
    $region40: #{tpu_custom_call.1} parent=1 // pred_region
      _
    $region41: #{tpu_custom_call.1} parent=1 // pred_fallthru
      _
    // Predicated region
    $region42: #{tpu_custom_call.1} parent=1 // pred_check
      _
    $region43: #{tpu_custom_call.1} parent=1 // pred_check_branch
      %69 = sbr.rel (0) target = $region45
    $region44: #{tpu_custom_call.1} parent=1 // pred_region
      _
    $region45: #{tpu_custom_call.1} parent=1 // pred_fallthru
      _
    // Predicated region
    $region46: #{tpu_custom_call.1} parent=1 // pred_check
      _
    $region47: #{tpu_custom_call.1} parent=1 // pred_check_branch
      %71 = sbr.rel (0) target = $region49
    $region48: #{tpu_custom_call.1} parent=1 // pred_region
      %s73 = ssub.s32 1024, 1024
      %74 = vsyncadd [#allocation9], %s73
      %s75 = sshll.u32 [#allocation8], 4
      %s76 = int_to_ptr.vmem [resolvable:$true] %s75
      %81 = dma.hbm_to_vmem [thread:$0]  %s11, 1024, %s76, [#allocation9], 64, 64, 4
    $region49: #{tpu_custom_call.1} parent=1 // pred_fallthru
      _
    // Predicated region
    $region50: #{tpu_custom_call.1} parent=1 // pred_check
      _
    $region51: #{tpu_custom_call.1} parent=1 // pred_check_branch
      %83 = sbr.rel (0) target = $region53
    $region52: #{tpu_custom_call.1} parent=1 // pred_region
      _
    $region53: #{tpu_custom_call.1} parent=1 // pred_fallthru
      _
    // Predicated region
    $region54: #{tpu_custom_call.1} parent=1 // pred_check
      _
    $region55: #{tpu_custom_call.1} parent=1 // pred_check_branch
      %85 = sbr.rel (0) target = $region57
    $region56: #{tpu_custom_call.1} parent=1 // pred_region
      %86 = dma.done [#allocation3], 128
    $region57: #{tpu_custom_call.1} parent=1 // pred_fallthru
      _
    // Predicated region
    $region58: #{tpu_custom_call.1} parent=1 // pred_check
      _
    $region59: #{tpu_custom_call.1} parent=1 // pred_check_branch
      %88 = sbr.rel (0) target = $region61
    $region60: #{tpu_custom_call.1} parent=1 // pred_region
      %89 = dma.done [#allocation6], 128
    $region61: #{tpu_custom_call.1} parent=1 // pred_fallthru
      _
    // Predicated region
    $region62: #{tpu_custom_call.1} parent=1 // pred_check
      _
    $region63: #{tpu_custom_call.1} parent=1 // pred_check_branch
      %91 = sbr.rel (0) target = $region65
    $region64: #{tpu_custom_call.1} parent=1 // pred_region
      %92 = dma.done [#allocation6], 1024
    $region65: #{tpu_custom_call.1} parent=1 // pred_fallthru
      _
    // Predicated region
    $region66: #{tpu_custom_call.1} parent=1 // pred_check
      _
    $region67: #{tpu_custom_call.1} parent=1 // pred_check_branch
      %94 = sbr.rel (0) target = $region69
    $region68: #{tpu_custom_call.1} parent=1 // pred_region
      %95 = dma.done [#allocation9], 1024
    $region69: #{tpu_custom_call.1} parent=1 // pred_fallthru
      _
    %v97 = vld [vmem:[#allocation2] sm:$0xff]
    %v98 = vld [vmem:[#allocation5] sm:$0xff]
    %v99 = vld [vmem:[%s2] sm:$0x1]
    %v100 = vld [vmem:[%s3] sm:$0x1]
    %vm101 = vcmask 130048
    %v102 = vsel %vm101, %v98, 0.0
    %v103 = vrot.slane %v102, 4
    %v104 = vadd.f32 %v102, %v103
    %v105 = vrot.slane %v104, 2
    %v106 = vadd.f32 %v104, %v105
    %v107 = vrot.slane %v106, 1
    %v108 = vadd.f32 %v106, %v107
    %v109 = vmul.f32 %v108, 0.125
    %v110 = vsub.f32 %v98, %v109
    %v111 = vmul.f32 %v110, %v110
    %v112 = vsel %vm101, %v111, 0.0
    %v113 = vrot.slane %v112, 4
    %v114 = vadd.f32 %v112, %v113
    %v115 = vrot.slane %v114, 2
    %v116 = vadd.f32 %v114, %v115
    %v117 = vrot.slane %v116, 1
    %v118 = vadd.f32 %v116, %v117
    %v119 = vmul.f32 %v118, 0.125
    %v120 = vadd.f32 %v119, 1e-05
    %v121 = vrsqrt.pop %v120
    %v122 = vmul.f32 %v99, %v121
    %v124 = vlaneseq
    %v125 = vshrl.u32 %v124, 7
    %v126 = vsub.s32 0, %v125
    %v127 = vrot.slane %v122, %v126
    %v129 = vmul.f32 %v98, %v127
    %v130 = vmul.f32 %v109, %v122
    %v131 = vsub.f32 %v100, %v130
    %v133 = vlaneseq
    %v134 = vshrl.u32 %v133, 7
    %v135 = vsub.s32 0, %v134
    %v136 = vrot.slane %v131, %v135
    %v138 = vadd.f32 %v129, %v136
    %v139 = vld [vmem:[%s4] sm:$0xf]
    %v140 = vld [vmem:[%s4 + $0x4] sm:$0xf]
    %v141 = vpack.c.bf16 %v97, %v97
    %v142 = vld [vmem:[%s5] sm:$0xf]
    %v143 = vld [vmem:[%s5 + $0x4] sm:$0xf]
    %v144 = vpack.c.bf16 %v138, %v138
    %v147 = vunpack.c.l.b16 %v142
    %v148 = vunpack.c.l.b16 %v143
    %v149 = vpack.c.b16 %v148, %v147
    %v152 = vsel %vm101, %v144, 0
    %154 = vmatprep.subr.bf16.mxu0 0
    %155 = vmatpush1.bf16.msra.mxu0 %v149
    %156 = vmatprep.subr.bf16.mxu0 0
    %157 = vmatpush1.bf16.msra.mxu0 0
    %158 = vmatprep.subr.bf16.mxu0 0
    %159 = vmatpush1.bf16.msra.mxu0 0
    %160 = vmatprep.subr.bf16.mxu0 0
    %161 = vmatpush1.bf16.msra.mxu0 0
    %162 = vmatprep.subr.bf16.mxu0 0
    %163 = vmatpush1.bf16.msra.mxu0 0
    %164 = vmatprep.subr.bf16.mxu0 0
    %165 = vmatpush1.bf16.msra.mxu0 0
    %166 = vmatprep.subr.bf16.mxu0 0
    %167 = vmatpush1.bf16.msra.mxu0 0
    %168 = vmatprep.subr.bf16.mxu0 0
    %169 = vmatpush1.bf16.msra.mxu0 0
    %170 = vmatprep.subr.bf16.mxu0 0
    %171 = vmatpush1.bf16.msra.mxu0 0
    %172 = vmatprep.subr.bf16.mxu0 0
    %173 = vmatpush1.bf16.msra.mxu0 0
    %174 = vmatprep.subr.bf16.mxu0 0
    %175 = vmatpush1.bf16.msra.mxu0 0
    %176 = vmatprep.subr.bf16.mxu0 0
    %177 = vmatpush1.bf16.msra.mxu0 0
    %178 = vmatprep.subr.bf16.mxu0 0
    %179 = vmatpush1.bf16.msra.mxu0 0
    %180 = vmatprep.subr.bf16.mxu0 0
    %181 = vmatpush1.bf16.msra.mxu0 0
    %182 = vmatprep.subr.bf16.mxu0 0
    %183 = vmatpush1.bf16.msra.mxu0 0
    %184 = vmatprep.subr.bf16.mxu0 0
    %185 = vmatpush1.bf16.msra.mxu0 0
    %186 = vmatprep.mubr.bf16.mxu0 0
    %187 = vmatmul.mubr.bf16.gmra.mrb[0].mxu0 %v152
    %v188 = vpop.f32.mrb[0].mxu0
    %v189 = vadd.f32 0.0, %v188
    %v190 = vpop.f32.mrb[0].mxu0
    %v191 = vpop.f32.mrb[0].mxu0
    %v192 = vpop.f32.mrb[0].mxu0
    %193 = vdwg.mxu0
    %v196 = vunpack.c.l.b16 %v139
    %v197 = vunpack.c.l.b16 %v140
    %v198 = vpack.c.b16 %v197, %v196
    %v201 = vsel %vm101, %v141, 0
    %203 = vmatprep.subr.bf16.mxu0 0
    %204 = vmatpush1.bf16.msra.mxu0 %v198
    %205 = vmatprep.subr.bf16.mxu0 0
    %206 = vmatpush1.bf16.msra.mxu0 0
    %207 = vmatprep.subr.bf16.mxu0 0
    %208 = vmatpush1.bf16.msra.mxu0 0
    %209 = vmatprep.subr.bf16.mxu0 0
    %210 = vmatpush1.bf16.msra.mxu0 0
    %211 = vmatprep.subr.bf16.mxu0 0
    %212 = vmatpush1.bf16.msra.mxu0 0
    %213 = vmatprep.subr.bf16.mxu0 0
    %214 = vmatpush1.bf16.msra.mxu0 0
    %215 = vmatprep.subr.bf16.mxu0 0
    %216 = vmatpush1.bf16.msra.mxu0 0
    %217 = vmatprep.subr.bf16.mxu0 0
    %218 = vmatpush1.bf16.msra.mxu0 0
    %219 = vmatprep.subr.bf16.mxu0 0
    %220 = vmatpush1.bf16.msra.mxu0 0
    %221 = vmatprep.subr.bf16.mxu0 0
    %222 = vmatpush1.bf16.msra.mxu0 0
    %223 = vmatprep.subr.bf16.mxu0 0
    %224 = vmatpush1.bf16.msra.mxu0 0
    %225 = vmatprep.subr.bf16.mxu0 0
    %226 = vmatpush1.bf16.msra.mxu0 0
    %227 = vmatprep.subr.bf16.mxu0 0
    %228 = vmatpush1.bf16.msra.mxu0 0
    %229 = vmatprep.subr.bf16.mxu0 0
    %230 = vmatpush1.bf16.msra.mxu0 0
    %231 = vmatprep.subr.bf16.mxu0 0
    %232 = vmatpush1.bf16.msra.mxu0 0
    %233 = vmatprep.subr.bf16.mxu0 0
    %234 = vmatpush1.bf16.msra.mxu0 0
    %235 = vmatprep.mubr.bf16.mxu0 0
    %236 = vmatmul.mubr.bf16.gmra.mrb[0].mxu0 %v201
    %v237 = vpop.f32.mrb[0].mxu0
    %v238 = vadd.f32 %v189, %v237
    %v239 = vpop.f32.mrb[0].mxu0
    %v240 = vpop.f32.mrb[0].mxu0
    %v241 = vpop.f32.mrb[0].mxu0
    %242 = vdwg.mxu0
    %v243 = vld [vmem:[%s6] sm:$0x1]
    %v244 = vld [vmem:[%s7] sm:$0x1]
    %v245 = vmax.f32 %v238, 0.0
    %v246 = vrot.slane %v245, 4
    %v247 = vadd.f32 %v245, %v246
    %v248 = vrot.slane %v247, 2
    %v249 = vadd.f32 %v247, %v248
    %v250 = vrot.slane %v249, 1
    %v251 = vadd.f32 %v249, %v250
    %v252 = vmul.f32 %v251, 0.125
    %v253 = vsub.f32 %v245, %v252
    %v254 = vmul.f32 %v253, %v253
    %v255 = vrot.slane %v254, 4
    %v256 = vadd.f32 %v254, %v255
    %v257 = vrot.slane %v256, 2
    %v258 = vadd.f32 %v256, %v257
    %v259 = vrot.slane %v258, 1
    %v260 = vadd.f32 %v258, %v259
    %v261 = vmul.f32 %v260, 0.125
    %v262 = vadd.f32 %v261, 1e-05
    %v263 = vrsqrt.pop %v262
    %v264 = vmul.f32 %v243, %v263
    %v266 = vlaneseq
    %v267 = vshrl.u32 %v266, 7
    %v268 = vsub.s32 0, %v267
    %v269 = vrot.slane %v264, %v268
    %v271 = vmul.f32 %v245, %v269
    %v272 = vmul.f32 %v252, %v264
    %v273 = vsub.f32 %v244, %v272
    %v275 = vlaneseq
    %v276 = vshrl.u32 %v275, 7
    %v277 = vsub.s32 0, %v276
    %v278 = vrot.slane %v273, %v277
    %v280 = vadd.f32 %v271, %v278
    %v281 = vld [vmem:[#allocation7] sm:$0xf]
    %v282 = vld [vmem:[#allocation7 + $0x4] sm:$0xf]
    %v283 = vld [vmem:[#allocation7 + $0x8] sm:$0xf]
    %v284 = vld [vmem:[#allocation7 + $0xc] sm:$0xf]
    %v285 = vld [vmem:[#allocation7 + $0x10] sm:$0xf]
    %v286 = vld [vmem:[#allocation7 + $0x14] sm:$0xf]
    %v287 = vld [vmem:[#allocation7 + $0x18] sm:$0xf]
    %v288 = vld [vmem:[#allocation7 + $0x1c] sm:$0xf]
    %v289 = vld [vmem:[#allocation7 + $0x20] sm:$0xf]
    %v290 = vld [vmem:[#allocation7 + $0x24] sm:$0xf]
    %v291 = vld [vmem:[#allocation7 + $0x28] sm:$0xf]
    %v292 = vld [vmem:[#allocation7 + $0x2c] sm:$0xf]
    %v293 = vld [vmem:[#allocation7 + $0x30] sm:$0xf]
    %v294 = vld [vmem:[#allocation7 + $0x34] sm:$0xf]
    %v295 = vld [vmem:[#allocation7 + $0x38] sm:$0xf]
    %v296 = vld [vmem:[#allocation7 + $0x3c] sm:$0xf]
    %v297 = vld [vmem:[%s9] sm:$0x1]
    %v298 = vld [vmem:[%s10] sm:$0x1]
    %v299 = vpack.c.bf16 %v280, %v280
    %v316 = vunpack.c.l.b16 %v281
    %v317 = vunpack.c.l.b16 %v282
    %v318 = vunpack.c.l.b16 %v283
    %v319 = vunpack.c.l.b16 %v284
    %v320 = vunpack.c.l.b16 %v285
    %v321 = vunpack.c.l.b16 %v286
    %v322 = vunpack.c.l.b16 %v287
    %v323 = vunpack.c.l.b16 %v288
    %v324 = vunpack.c.l.b16 %v289
    %v325 = vunpack.c.l.b16 %v290
    %v326 = vunpack.c.l.b16 %v291
    %v327 = vunpack.c.l.b16 %v292
    %v328 = vunpack.c.l.b16 %v293
    %v329 = vunpack.c.l.b16 %v294
    %v330 = vunpack.c.l.b16 %v295
    %v331 = vunpack.c.l.b16 %v296
    %v332 = vpack.c.b16 %v317, %v316
    %v333 = vpack.c.b16 %v319, %v318
    %v334 = vpack.c.b16 %v321, %v320
    %v335 = vpack.c.b16 %v323, %v322
    %v336 = vpack.c.b16 %v325, %v324
    %v337 = vpack.c.b16 %v327, %v326
    %v338 = vpack.c.b16 %v329, %v328
    %v339 = vpack.c.b16 %v331, %v330
    %348 = vmatprep.subr.bf16.mxu0 0
    %349 = vmatpush1.bf16.msra.mxu0 %v332
    %350 = vmatprep.subr.bf16.mxu0 0
    %351 = vmatpush1.bf16.msra.mxu0 %v333
    %352 = vmatprep.subr.bf16.mxu0 0
    %353 = vmatpush1.bf16.msra.mxu0 %v334
    %354 = vmatprep.subr.bf16.mxu0 0
    %355 = vmatpush1.bf16.msra.mxu0 %v335
    %356 = vmatprep.subr.bf16.mxu0 0
    %357 = vmatpush1.bf16.msra.mxu0 %v336
    %358 = vmatprep.subr.bf16.mxu0 0
    %359 = vmatpush1.bf16.msra.mxu0 %v337
    %360 = vmatprep.subr.bf16.mxu0 0
    %361 = vmatpush1.bf16.msra.mxu0 %v338
    %362 = vmatprep.subr.bf16.mxu0 0
    %363 = vmatpush1.bf16.msra.mxu0 %v339
    %364 = vmatprep.subr.bf16.mxu0 0
    %365 = vmatpush1.bf16.msra.mxu0 0
    %366 = vmatprep.subr.bf16.mxu0 0
    %367 = vmatpush1.bf16.msra.mxu0 0
    %368 = vmatprep.subr.bf16.mxu0 0
    %369 = vmatpush1.bf16.msra.mxu0 0
    %370 = vmatprep.subr.bf16.mxu0 0
    %371 = vmatpush1.bf16.msra.mxu0 0
    %372 = vmatprep.subr.bf16.mxu0 0
    %373 = vmatpush1.bf16.msra.mxu0 0
    %374 = vmatprep.subr.bf16.mxu0 0
    %375 = vmatpush1.bf16.msra.mxu0 0
    %376 = vmatprep.subr.bf16.mxu0 0
    %377 = vmatpush1.bf16.msra.mxu0 0
    %378 = vmatprep.subr.bf16.mxu0 0
    %379 = vmatpush1.bf16.msra.mxu0 0
    %380 = vmatprep.mubr.bf16.mxu0 0
    %381 = vmatmul.mubr.bf16.gmra.mrb[0].mxu0 %v299
    %v382 = vpop.f32.mrb[0].mxu0
    %v383 = vadd.f32 0.0, %v382
    %v384 = vpop.f32.mrb[0].mxu0
    %v385 = vpop.f32.mrb[0].mxu0
    %v386 = vpop.f32.mrb[0].mxu0
    %387 = vdwg.mxu0
    %v388 = vmax.f32 %v383, 0.0
    %v389 = vrot.slane %v388, 4
    %v390 = vadd.f32 %v388, %v389
    %v391 = vrot.slane %v390, 2
    %v392 = vadd.f32 %v390, %v391
    %v393 = vrot.slane %v392, 1
    %v394 = vadd.f32 %v392, %v393
    %v395 = vmul.f32 %v394, 0.125
    %v396 = vsub.f32 %v388, %v395
    %v397 = vmul.f32 %v396, %v396
    %v398 = vrot.slane %v397, 4
    %v399 = vadd.f32 %v397, %v398
    %v400 = vrot.slane %v399, 2
    %v401 = vadd.f32 %v399, %v400
    %v402 = vrot.slane %v401, 1
    %v403 = vadd.f32 %v401, %v402
    %v404 = vmul.f32 %v403, 0.125
    %v405 = vadd.f32 %v404, 1e-05
    %v406 = vrsqrt.pop %v405
    %v407 = vmul.f32 %v297, %v406
    %v409 = vlaneseq
    %v410 = vshrl.u32 %v409, 7
    %v411 = vsub.s32 0, %v410
    %v412 = vrot.slane %v407, %v411
    %v414 = vmul.f32 %v388, %v412
    %v415 = vmul.f32 %v395, %v407
    %v416 = vsub.f32 %v298, %v415
    %v418 = vlaneseq
    %v419 = vshrl.u32 %v418, 7
    %v420 = vsub.s32 0, %v419
    %v421 = vrot.slane %v416, %v420
    %v423 = vadd.f32 %v414, %v421
    %v424 = vld [vmem:[#allocation8] sm:$0xf]
    %v425 = vld [vmem:[#allocation8 + $0x4] sm:$0xf]
    %v426 = vld [vmem:[#allocation8 + $0x8] sm:$0xf]
    %v427 = vld [vmem:[#allocation8 + $0xc] sm:$0xf]
    %v428 = vld [vmem:[#allocation8 + $0x10] sm:$0xf]
    %v429 = vld [vmem:[#allocation8 + $0x14] sm:$0xf]
    %v430 = vld [vmem:[#allocation8 + $0x18] sm:$0xf]
    %v431 = vld [vmem:[#allocation8 + $0x1c] sm:$0xf]
    %v432 = vld [vmem:[#allocation8 + $0x20] sm:$0xf]
    %v433 = vld [vmem:[#allocation8 + $0x24] sm:$0xf]
    %v434 = vld [vmem:[#allocation8 + $0x28] sm:$0xf]
    %v435 = vld [vmem:[#allocation8 + $0x2c] sm:$0xf]
    %v436 = vld [vmem:[#allocation8 + $0x30] sm:$0xf]
    %v437 = vld [vmem:[#allocation8 + $0x34] sm:$0xf]
    %v438 = vld [vmem:[#allocation8 + $0x38] sm:$0xf]
    %v439 = vld [vmem:[#allocation8 + $0x3c] sm:$0xf]
    %v440 = vld [vmem:[%s12] sm:$0x1]
    %v441 = vpack.c.bf16 %v423, %v423
    %v443 = vlaneseq
    %v444 = vshrl.u32 %v443, 7
    %v445 = vsub.s32 0, %v444
    %v446 = vrot.slane %v440, %v445
    %v464 = vunpack.c.l.b16 %v424
    %v465 = vunpack.c.l.b16 %v425
    %v466 = vunpack.c.l.b16 %v426
    %v467 = vunpack.c.l.b16 %v427
    %v468 = vunpack.c.l.b16 %v428
    %v469 = vunpack.c.l.b16 %v429
    %v470 = vunpack.c.l.b16 %v430
    %v471 = vunpack.c.l.b16 %v431
    %v472 = vunpack.c.l.b16 %v432
    %v473 = vunpack.c.l.b16 %v433
    %v474 = vunpack.c.l.b16 %v434
    %v475 = vunpack.c.l.b16 %v435
    %v476 = vunpack.c.l.b16 %v436
    %v477 = vunpack.c.l.b16 %v437
    %v478 = vunpack.c.l.b16 %v438
    %v479 = vunpack.c.l.b16 %v439
    %v480 = vpack.c.b16 %v465, %v464
    %v481 = vpack.c.b16 %v467, %v466
    %v482 = vpack.c.b16 %v469, %v468
    %v483 = vpack.c.b16 %v471, %v470
    %v484 = vpack.c.b16 %v473, %v472
    %v485 = vpack.c.b16 %v475, %v474
    %v486 = vpack.c.b16 %v477, %v476
    %v487 = vpack.c.b16 %v479, %v478
    %496 = vmatprep.subr.bf16.mxu0 0
    %497 = vmatpush1.bf16.msra.mxu0 %v480
    %498 = vmatprep.subr.bf16.mxu0 0
    %499 = vmatpush1.bf16.msra.mxu0 %v481
    %500 = vmatprep.subr.bf16.mxu0 0
    %501 = vmatpush1.bf16.msra.mxu0 %v482
    %502 = vmatprep.subr.bf16.mxu0 0
    %503 = vmatpush1.bf16.msra.mxu0 %v483
    %504 = vmatprep.subr.bf16.mxu0 0
    %505 = vmatpush1.bf16.msra.mxu0 %v484
    %506 = vmatprep.subr.bf16.mxu0 0
    %507 = vmatpush1.bf16.msra.mxu0 %v485
    %508 = vmatprep.subr.bf16.mxu0 0
    %509 = vmatpush1.bf16.msra.mxu0 %v486
    %510 = vmatprep.subr.bf16.mxu0 0
    %511 = vmatpush1.bf16.msra.mxu0 %v487
    %512 = vmatprep.subr.bf16.mxu0 0
    %513 = vmatpush1.bf16.msra.mxu0 0
    %514 = vmatprep.subr.bf16.mxu0 0
    %515 = vmatpush1.bf16.msra.mxu0 0
    %516 = vmatprep.subr.bf16.mxu0 0
    %517 = vmatpush1.bf16.msra.mxu0 0
    %518 = vmatprep.subr.bf16.mxu0 0
    %519 = vmatpush1.bf16.msra.mxu0 0
    %520 = vmatprep.subr.bf16.mxu0 0
    %521 = vmatpush1.bf16.msra.mxu0 0
    %522 = vmatprep.subr.bf16.mxu0 0
    %523 = vmatpush1.bf16.msra.mxu0 0
    %524 = vmatprep.subr.bf16.mxu0 0
    %525 = vmatpush1.bf16.msra.mxu0 0
    %526 = vmatprep.subr.bf16.mxu0 0
    %527 = vmatpush1.bf16.msra.mxu0 0
    %528 = vmatprep.mubr.bf16.mxu0 0
    %529 = vmatmul.mubr.bf16.gmra.mrb[0].mxu0 %v441
    %v530 = vpop.f32.mrb[0].mxu0
    %v531 = vadd.f32 %v446, %v530
    %v532 = vpop.f32.mrb[0].mxu0
    %v533 = vpop.f32.mrb[0].mxu0
    %v534 = vpop.f32.mrb[0].mxu0
    %535 = vdwg.mxu0
    %536 = vst [vmem:[#allocation10] sm:$0xff] %v531
    // Predicated region
    $region70: #{tpu_custom_call.1} parent=1 // pred_check
      _
    $region71: #{tpu_custom_call.1} parent=1 // pred_check_branch
      %538 = sbr.rel (0) target = $region73
    $region72: #{tpu_custom_call.1} parent=1 // pred_region
      %s540 = ssub.s32 128, 128
      %541 = vsyncadd [#allocation4], %s540
      %s543 = sshll.u32 [#allocation10], 4
      %s544 = int_to_ptr.vmem [resolvable:$true] %s543
      %546 = dma.vmem_to_hbm [thread:$0]  %s544, 128, %s13, [#allocation4]
    $region73: #{tpu_custom_call.1} parent=1 // pred_fallthru
      _
    // Predicated region
    $region74: #{tpu_custom_call.1} parent=1 // pred_check
      _
    $region75: #{tpu_custom_call.1} parent=1 // pred_check_branch
      %548 = sbr.rel (0) target = $region77
    $region76: #{tpu_custom_call.1} parent=1 // pred_region
      %549 = dma.done [#allocation4], 128
    $region77: #{tpu_custom_call.1} parent=1 // pred_fallthru
      _
    %550 = vsyncpa [#allocation3], 1
    %551 = vsyncpa [#allocation6], 1
    %552 = vsyncpa [#allocation9], 1
    %553 = vsyncpa [#allocation4], 1

</llo_original>
